<compile_context>
chip_gen: v7x
topology: tpu7x:2x2x1
jax: 0.10.0
libtpu: 0.0.40
codegen_flags: <defaults>
</compile_context>

<pallas_src>
import math

import jax
import jax.numpy as jnp
from jax.experimental import pallas as pl
from jax.experimental.pallas import tpu as pltpu


def _round_up(x, m):
    return ((x + m - 1) // m) * m


# --------------------------------------------------------------------------
# Pallas kernel: tiled matmul, accumulating directly into the output block.
# Grid = (M tiles ["parallel"], K tiles ["arbitrary", reduction last]).
# --------------------------------------------------------------------------
def _matmul_kernel(x_ref, w_ref, o_ref):
    @pl.when(pl.program_id(1) == 0)
    def _init():
        o_ref[...] = jnp.zeros_like(o_ref)

    # Default MXU precision (bf16 passes, f32 accumulation via
    # preferred_element_type); output block is f32 and stays resident
    # across the K axis, so accumulate into it directly (no scratch).
    o_ref[...] += jnp.dot(
        x_ref[...], w_ref[...], preferred_element_type=jnp.float32
    )


def pallas_matmul(x2, w2, *, tm=256, tk=512, max_single_k=2048):
    """x2: [M, Kc] f32, w2: [Kc, N] f32 -> [M, N] f32."""
    M, Kc = x2.shape
    Kc2, N = w2.shape
    assert Kc == Kc2

    # Lane-dense output: pad N (lanes) up to a multiple of 128.
    Np = _round_up(N, 128)
    if Np != N:
        w2 = jnp.pad(w2, ((0, 0), (0, Np - N)))

    # K tiling: collapse to a single reduction step when padded K is small,
    # otherwise tile at tk (a multiple of 128).
    Kp128 = _round_up(Kc, 128)
    tk = Kp128 if Kp128 <= max_single_k else tk
    Kp = _round_up(Kc, tk)
    if Kp != Kc:
        x2 = jnp.pad(x2, ((0, 0), (0, Kp - Kc)))
        w2 = jnp.pad(w2, ((0, Kp - Kc), (0, 0)))

    # M tiling: a single sublane-aligned block when M is small, else tm blocks.
    tm = min(tm, _round_up(M, 8))
    Mp = _round_up(M, tm)
    if Mp != M:
        x2 = jnp.pad(x2, ((0, Mp - M), (0, 0)))

    grid = (Mp // tm, Kp // tk)

    cost = pl.CostEstimate(
        flops=2 * Mp * Kp * Np,
        transcendentals=0,
        bytes_accessed=4 * (Mp * Kp + Kp * Np + Mp * Np),
    )

    out = pl.pallas_call(
        _matmul_kernel,
        out_shape=jax.ShapeDtypeStruct((Mp, Np), jnp.float32),
        grid_spec=pltpu.PrefetchScalarGridSpec(
            num_scalar_prefetch=0,
            grid=grid,
            in_specs=[
                pl.BlockSpec((tm, tk), lambda i, k: (i, k)),
                pl.BlockSpec((tk, Np), lambda i, k: (k, 0)),
            ],
            out_specs=pl.BlockSpec((tm, Np), lambda i, k: (i, 0)),
        ),
        compiler_params=pltpu.CompilerParams(
            dimension_semantics=("parallel", "arbitrary"),
        ),
        cost_estimate=cost,
    )(x2, w2)
    return out[:M, :N]


# --------------------------------------------------------------------------
# Parameter / index glue (plain JAX) replicating BasicS2ConvV2.forward gathers.
# --------------------------------------------------------------------------
def build_w_eff(Wparam, idx_map, trace_idxv_rot, trace_idx_rot, K, A):
    """Replicates:
         W = self.W[:, :, idx_map].reshape(D, C, K, A)
         W = W[..., None].expand(..., A)
         W = gather(W, 2, idxs_k); W = gather(W, 3, idxs_a)
       giving W_eff[d,c,k,a,r] = Wg[d, c, trace_idxv_rot[r,k], trace_idx_rot[r,a]].
    """
    D, C, _ = Wparam.shape
    Wg = Wparam[:, :, idx_map].reshape(D, C, K, A)                  # [D, C, K, A]
    idxK = jnp.broadcast_to(trace_idxv_rot[:, :, None], (A, K, A))  # [R, K, A]
    idxA = jnp.broadcast_to(trace_idx_rot[:, None, :], (A, K, A))   # [R, K, A]
    Wtmp = Wg[:, :, idxK, idxA]                                     # [D, C, R, K, A]
    W_eff = jnp.transpose(Wtmp, (0, 1, 3, 4, 2))                    # [D, C, K, A, R]
    return W_eff


def s2conv_forward(x, Wparam, idx_map, trace_idxv_rot, trace_idx_rot):
    """x: [B, C, K, P, A] -> out: [B, D, P, A]  (einsum 'dckar,bckpa->bdpr')."""
    B, C, K, P, A = x.shape
    D = Wparam.shape[0]
    R = A

    W_eff = build_w_eff(Wparam, idx_map, trace_idxv_rot, trace_idx_rot, K, A)

    # Flatten the (c, k, a) contraction: contraction axis innermost for X,
    # output (d, r) innermost for W (lane-dense slabs for the kernel).
    X2 = jnp.transpose(x, (0, 3, 1, 2, 4)).reshape(B * P, C * K * A)
    W2 = jnp.transpose(W_eff, (1, 2, 3, 0, 4)).reshape(C * K * A, D * R)

    out2 = pallas_matmul(X2, W2)                              # [B*P, D*R]
    out = out2.reshape(B, P, D, R).transpose(0, 2, 1, 3)      # [B, D, P, R]
    return out


# --------------------------------------------------------------------------
# Main
# --------------------------------------------------------------------------
if __name__ == "__main__":
    # kanchor = 12 configuration: icosahedron => kernel_size = 13, anchor_size = 12,
    # n_param_effective = 36 (asserted in BasicS2ConvV2.__init__).
    B, C_in, P = 2, 4, 16
    D_out = 8
    K, A, n_eff = 13, 12, 36

    key = jax.random.PRNGKey(0)
    kx, kw = jax.random.split(key)

    # Grouped features [b, c1, k, p, a] (output of inter_so3conv_grouping).
    x = jax.random.normal(kx, (B, C_in, K, P, A), dtype=jnp.float32)

    # W ~ xavier_normal_ with gain = calculate_gain('relu') = sqrt(2):
    # std = gain * sqrt(2 / (fan_in + fan_out)), fan_in = C*n_eff, fan_out = D*n_eff.
    std = math.sqrt(2.0) * math.sqrt(2.0 / (C_in * n_eff + D_out * n_eff))
    Wparam = std * jax.random.normal(kw, (D_out, C_in, n_eff), dtype=jnp.float32)

    # Deterministic synthetic index buffers (see TODO(synk) above):
    # idx_map: surjective map [K*A] -> [0, n_eff)
    idx_map = jnp.arange(K * A, dtype=jnp.int32) % n_eff
    # trace_idxv_rot: [A, K], values in [0, K)  (permutation-like per anchor)
    trace_idxv_rot = (jnp.arange(A, dtype=jnp.int32)[:, None]
                      + jnp.arange(K, dtype=jnp.int32)[None, :]) % K
    # trace_idx_rot: [A, A], values in [0, A)
    trace_idx_rot = (2 * jnp.arange(A, dtype=jnp.int32)[:, None]
                     + jnp.arange(A, dtype=jnp.int32)[None, :]) % A

    out = s2conv_forward(x, Wparam, idx_map, trace_idxv_rot, trace_idx_rot)
    out = jax.block_until_ready(out)
    assert out.shape == (B, D_out, P, A), out.shape

    # Pure-JAX reference for correctness (HIGHEST precision reference; the
    # kernel uses default bf16 MXU passes with f32 accumulation, so compare
    # with a correspondingly relaxed tolerance).
    W_eff = build_w_eff(Wparam, idx_map, trace_idxv_rot, trace_idx_rot, K, A)
    ref = jnp.einsum('dckar,bckpa->bdpr', W_eff, x,
                     precision=jax.lax.Precision.HIGHEST)
    max_err = float(jnp.max(jnp.abs(out - ref)))
    assert jnp.allclose(out, ref, atol=5e-2, rtol=5e-2), max_err

    print("KERNEL_OK")
</pallas_src>

<mosaic_0001>
module attributes {stable_mosaic.version = 11 : i64} {
  func.func @_matmul_kernel(%arg0: i32, %arg1: i32, %arg2: memref<32x640xf32, #tpu.memory_space<vmem>>, %arg3: memref<640x128xf32, #tpu.memory_space<vmem>>, %arg4: memref<32x128xf32, #tpu.memory_space<vmem>>) attributes {dimension_semantics = [#tpu.dimension_semantics<parallel>, #tpu.dimension_semantics<arbitrary>], iteration_bounds = array<i64: 1, 1>, scalar_prefetch = 0 : i64, scratch_operands = 0 : i64, tpu.core_type = #tpu.core_type<tc>, window_params = [{transform_indices = @transform_0, window_bounds = array<i64: 32, 640>}, {transform_indices = @transform_1, window_bounds = array<i64: 640, 128>}, {transform_indices = @transform_2, window_bounds = array<i64: 32, 128>}]} {
    %c0_i32 = arith.constant 0 : i32
    %0 = arith.cmpi eq, %arg1, %c0_i32 : i32
    %1 = arith.extui %0 : i1 to i32
    %c0_i32_0 = arith.constant 0 : i32
    %2 = arith.cmpi ne, %1, %c0_i32_0 : i32
    scf.if %2 {
      %cst_8 = arith.constant 0.000000e+00 : f32
      %9 = vector.broadcast %cst_8 : f32 to vector<32x128xf32>
      %c0_9 = arith.constant 0 : index
      %c0_10 = arith.constant 0 : index
      %10 = vector.load %arg4[%c0_9, %c0_10] : memref<32x128xf32, #tpu.memory_space<vmem>>, vector<32x128xf32>
      tpu.vector_store %arg4[%c0_9, %c0_10], %9 {strides = array<i32>} : memref<32x128xf32, #tpu.memory_space<vmem>>, vector<32x128xf32>,
    } else {
    }
    %c0 = arith.constant 0 : index
    %c0_1 = arith.constant 0 : index
    %3 = vector.load %arg4[%c0, %c0_1] : memref<32x128xf32, #tpu.memory_space<vmem>>, vector<32x128xf32>
    %c0_2 = arith.constant 0 : index
    %c0_3 = arith.constant 0 : index
    %4 = vector.load %arg2[%c0_2, %c0_3] : memref<32x640xf32, #tpu.memory_space<vmem>>, vector<32x640xf32>
    %c0_4 = arith.constant 0 : index
    %c0_5 = arith.constant 0 : index
    %5 = vector.load %arg3[%c0_4, %c0_5] : memref<640x128xf32, #tpu.memory_space<vmem>>, vector<640x128xf32>
    %cst = arith.constant dense<0.000000e+00> : vector<32x128xf32>
    %6 = tpu.matmul %4, %5, %cst {dimension_numbers = #tpu.dot_dimension_numbers<[1], [0], [0], [1], [0, 0, 1, 1], [], []>} : vector<32x640xf32>, vector<640x128xf32>, vector<32x128xf32> -> vector<32x128xf32>
    %7 = arith.addf %3, %6 : vector<32x128xf32>
    %c0_6 = arith.constant 0 : index
    %c0_7 = arith.constant 0 : index
    %8 = vector.load %arg4[%c0_6, %c0_7] : memref<32x128xf32, #tpu.memory_space<vmem>>, vector<32x128xf32>
    tpu.vector_store %arg4[%c0_6, %c0_7], %7 {strides = array<i32>} : memref<32x128xf32, #tpu.memory_space<vmem>>, vector<32x128xf32>,
    return
  }
  func.func @transform_0(%arg0: i32, %arg1: i32) -> (i32, i32) {
    %c0_i32 = arith.constant 0 : i32
    return %arg0, %arg1 : i32, i32
  }
  func.func @transform_1(%arg0: i32, %arg1: i32) -> (i32, i32) {
    %c0_i32 = arith.constant 0 : i32
    %c0_i32_0 = arith.constant 0 : i32
    return %arg1, %c0_i32 : i32, i32
  }
  func.func @transform_2(%arg0: i32, %arg1: i32) -> (i32, i32) {
    %c0_i32 = arith.constant 0 : i32
    %c0_i32_0 = arith.constant 0 : i32
    return %arg0, %c0_i32 : i32, i32
  }
}

</mosaic_0001>

<llo_original>
// kernel: tpu_custom_call.1
$region0: #{tpu_custom_call.1}
  #allocation0 [shape = 'u32[]', space=smem, size = 0x4, offset = 0x4, fixed_abs, tag = 'smem constant byte address 0x4 - core index']
  #allocation1 [shape = 'u32[144,128]{1,0:T(1,128)}', space=vmem, size = 0x12000, scoped, tag = 'internal scratch']
  %s0 = inlined_call_operand.hbm [shape: f32[32,640], index: 0, kind: input, shape index: {}]
  %s1 = inlined_call_operand.hbm [shape: f32[640,128], index: 1, kind: input, shape index: {}]
  %s2 = inlined_call_operand.hbm [shape: f32[32,128], index: 2, kind: output, shape index: {}]
  %s3 = sld [smem:[#allocation0]]
  $region30: #{tpu_custom_call.1} parent=0
    _
  %s5 = ssub.s32 1, %s3
  %s6 = scalar_select 0, %s5, %s3
  $region1: #{tpu_custom_call.1} parent=0
    #allocation2 [shape = 'u8[81920]{0}', space=vmem, size = 0x14000, scoped, tag = 'input window, operand 0, single buffered']
    #allocation3 [shape = 's32[1]{0}', space=sflag, size = 0x4, scoped, tag = 'scoped memory for tpu_custom_call.1']
    #allocation4 [shape = 's32[1]{0}', space=sflag, size = 0x4, scoped, tag = 'scoped memory for tpu_custom_call.1']
    #allocation5 [shape = 'u8[327680]{0}', space=vmem, size = 0x50000, scoped, tag = 'input window, operand 1, single buffered']
    #allocation6 [shape = 's32[1]{0}', space=sflag, size = 0x4, scoped, tag = 'scoped memory for tpu_custom_call.1']
    #allocation7 [shape = 'u8[16384]{0}', space=vmem, size = 0x4000, scoped, tag = 'output window, operand 0, single buffered']
    %7 = vsyncpa [#allocation3], 0
    %8 = vsyncpa [#allocation6], 0
    %9 = vsyncpa [#allocation4], 0
    // Predicated region
    $region2: #{tpu_custom_call.1} parent=1 // pred_check
      _
    $region3: #{tpu_custom_call.1} parent=1 // pred_check_branch
      %11 = sbr.rel (0) target = $region5
    $region4: #{tpu_custom_call.1} parent=1 // pred_region
      %s13 = ssub.s32 2560, 2560
      %14 = vsyncadd [#allocation3], %s13
      %s15 = sshll.u32 [#allocation2], 4
      %s16 = int_to_ptr.vmem [resolvable:$true] %s15
      %21 = dma.hbm_to_vmem [thread:$0]  %s0, 2560, %s16, [#allocation3], 640, 640, 40
    $region5: #{tpu_custom_call.1} parent=1 // pred_fallthru
      _
    // Predicated region
    $region6: #{tpu_custom_call.1} parent=1 // pred_check
      _
    $region7: #{tpu_custom_call.1} parent=1 // pred_check_branch
      %23 = sbr.rel (0) target = $region9
    $region8: #{tpu_custom_call.1} parent=1 // pred_region
      %s25 = ssub.s32 10240, 10240
      %26 = vsyncadd [#allocation6], %s25
      %s27 = sshll.u32 [#allocation5], 4
      %s28 = int_to_ptr.vmem [resolvable:$true] %s27
      %33 = dma.hbm_to_vmem [thread:$0]  %s1, 10240, %s28, [#allocation6], 128, 128, 8
    $region9: #{tpu_custom_call.1} parent=1 // pred_fallthru
      _
    // Predicated region
    $region10: #{tpu_custom_call.1} parent=1 // pred_check
      _
    $region11: #{tpu_custom_call.1} parent=1 // pred_check_branch
      %35 = sbr.rel (0) target = $region13
    $region12: #{tpu_custom_call.1} parent=1 // pred_region
      %36 = dma.done [#allocation3], 2560
    $region13: #{tpu_custom_call.1} parent=1 // pred_fallthru
      _
    // Predicated region
    $region14: #{tpu_custom_call.1} parent=1 // pred_check
      _
    $region15: #{tpu_custom_call.1} parent=1 // pred_check_branch
      %38 = sbr.rel (0) target = $region17
    $region16: #{tpu_custom_call.1} parent=1 // pred_region
      %39 = dma.done [#allocation6], 10240
    $region17: #{tpu_custom_call.1} parent=1 // pred_fallthru
      _
    %p40 = scmp.eq.s32.totalorder 0, 0
    // Predicated region
    $region18: #{tpu_custom_call.1} parent=1 // pred_check
      %p41 = pneg %p40
    $region19: #{tpu_custom_call.1} parent=1 // pred_check_branch
      %43 = sbr.rel (%p41) target = $region21
    $region20: #{tpu_custom_call.1} parent=1 // pred_region
      %44 = vst [vmem:[#allocation7] sm:$0xff] 0.0
      %45 = vst [vmem:[#allocation7 + $0x8] sm:$0xff] 0.0
      %46 = vst [vmem:[#allocation7 + $0x10] sm:$0xff] 0.0
      %47 = vst [vmem:[#allocation7 + $0x18] sm:$0xff] 0.0
    $region21: #{tpu_custom_call.1} parent=1 // pred_fallthru
      _
    %v48 = vld [vmem:[#allocation7] sm:$0xff]
    %v49 = vld [vmem:[#allocation7 + $0x8] sm:$0xff]
    %v50 = vld [vmem:[#allocation7 + $0x10] sm:$0xff]
    %v51 = vld [vmem:[#allocation7 + $0x18] sm:$0xff]
    %v52 = vld [vmem:[#allocation2] sm:$0xff]
    %v53 = vld [vmem:[#allocation2 + $0x8] sm:$0xff]
    %v54 = vld [vmem:[#allocation2 + $0x10] sm:$0xff]
    %v55 = vld [vmem:[#allocation2 + $0x18] sm:$0xff]
    %v56 = vld [vmem:[#allocation2 + $0x20] sm:$0xff]
    %v57 = vld [vmem:[#allocation2 + $0x28] sm:$0xff]
    %v58 = vld [vmem:[#allocation2 + $0x30] sm:$0xff]
    %v59 = vld [vmem:[#allocation2 + $0x38] sm:$0xff]
    %v60 = vld [vmem:[#allocation2 + $0x40] sm:$0xff]
    %v61 = vld [vmem:[#allocation2 + $0x48] sm:$0xff]
    %v62 = vld [vmem:[#allocation2 + $0x50] sm:$0xff]
    %v63 = vld [vmem:[#allocation2 + $0x58] sm:$0xff]
    %v64 = vld [vmem:[#allocation2 + $0x60] sm:$0xff]
    %v65 = vld [vmem:[#allocation2 + $0x68] sm:$0xff]
    %v66 = vld [vmem:[#allocation2 + $0x70] sm:$0xff]
    %v67 = vld [vmem:[#allocation2 + $0x78] sm:$0xff]
    %v68 = vld [vmem:[#allocation2 + $0x80] sm:$0xff]
    %v69 = vld [vmem:[#allocation2 + $0x88] sm:$0xff]
    %v70 = vld [vmem:[#allocation2 + $0x90] sm:$0xff]
    %v71 = vld [vmem:[#allocation2 + $0x98] sm:$0xff]
    %v72 = vld [vmem:[#allocation5] sm:$0xff]
    %v73 = vld [vmem:[#allocation5 + $0x8] sm:$0xff]
    %v74 = vld [vmem:[#allocation5 + $0x10] sm:$0xff]
    %v75 = vld [vmem:[#allocation5 + $0x18] sm:$0xff]
    %v76 = vld [vmem:[#allocation5 + $0x20] sm:$0xff]
    %v77 = vld [vmem:[#allocation5 + $0x28] sm:$0xff]
    %v78 = vld [vmem:[#allocation5 + $0x30] sm:$0xff]
    %v79 = vld [vmem:[#allocation5 + $0x38] sm:$0xff]
    %v80 = vld [vmem:[#allocation5 + $0x40] sm:$0xff]
    %v81 = vld [vmem:[#allocation5 + $0x48] sm:$0xff]
    %v82 = vld [vmem:[#allocation5 + $0x50] sm:$0xff]
    %v83 = vld [vmem:[#allocation5 + $0x58] sm:$0xff]
    %v84 = vld [vmem:[#allocation5 + $0x60] sm:$0xff]
    %v85 = vld [vmem:[#allocation5 + $0x68] sm:$0xff]
    %v86 = vld [vmem:[#allocation5 + $0x70] sm:$0xff]
    %v87 = vld [vmem:[#allocation5 + $0x78] sm:$0xff]
    %v88 = vld [vmem:[#allocation5 + $0x80] sm:$0xff]
    %v89 = vld [vmem:[#allocation5 + $0x88] sm:$0xff]
    %v90 = vld [vmem:[#allocation5 + $0x90] sm:$0xff]
    %v91 = vld [vmem:[#allocation5 + $0x98] sm:$0xff]
    %v92 = vld [vmem:[#allocation5 + $0xa0] sm:$0xff]
    %v93 = vld [vmem:[#allocation5 + $0xa8] sm:$0xff]
    %v94 = vld [vmem:[#allocation5 + $0xb0] sm:$0xff]
    %v95 = vld [vmem:[#allocation5 + $0xb8] sm:$0xff]
    %v96 = vld [vmem:[#allocation5 + $0xc0] sm:$0xff]
    %v97 = vld [vmem:[#allocation5 + $0xc8] sm:$0xff]
    %v98 = vld [vmem:[#allocation5 + $0xd0] sm:$0xff]
    %v99 = vld [vmem:[#allocation5 + $0xd8] sm:$0xff]
    %v100 = vld [vmem:[#allocation5 + $0xe0] sm:$0xff]
    %v101 = vld [vmem:[#allocation5 + $0xe8] sm:$0xff]
    %v102 = vld [vmem:[#allocation5 + $0xf0] sm:$0xff]
    %v103 = vld [vmem:[#allocation5 + $0xf8] sm:$0xff]
    %v104 = vld [vmem:[#allocation5 + $0x100] sm:$0xff]
    %v105 = vld [vmem:[#allocation5 + $0x108] sm:$0xff]
    %v106 = vld [vmem:[#allocation5 + $0x110] sm:$0xff]
    %v107 = vld [vmem:[#allocation5 + $0x118] sm:$0xff]
    %v108 = vld [vmem:[#allocation5 + $0x120] sm:$0xff]
    %v109 = vld [vmem:[#allocation5 + $0x128] sm:$0xff]
    %v110 = vld [vmem:[#allocation5 + $0x130] sm:$0xff]
    %v111 = vld [vmem:[#allocation5 + $0x138] sm:$0xff]
    %v112 = vld [vmem:[#allocation5 + $0x140] sm:$0xff]
    %v113 = vld [vmem:[#allocation5 + $0x148] sm:$0xff]
    %v114 = vld [vmem:[#allocation5 + $0x150] sm:$0xff]
    %v115 = vld [vmem:[#allocation5 + $0x158] sm:$0xff]
    %v116 = vld [vmem:[#allocation5 + $0x160] sm:$0xff]
    %v117 = vld [vmem:[#allocation5 + $0x168] sm:$0xff]
    %v118 = vld [vmem:[#allocation5 + $0x170] sm:$0xff]
    %v119 = vld [vmem:[#allocation5 + $0x178] sm:$0xff]
    %v120 = vld [vmem:[#allocation5 + $0x180] sm:$0xff]
    %v121 = vld [vmem:[#allocation5 + $0x188] sm:$0xff]
    %v122 = vld [vmem:[#allocation5 + $0x190] sm:$0xff]
    %v123 = vld [vmem:[#allocation5 + $0x198] sm:$0xff]
    %v124 = vld [vmem:[#allocation5 + $0x1a0] sm:$0xff]
    %v125 = vld [vmem:[#allocation5 + $0x1a8] sm:$0xff]
    %v126 = vld [vmem:[#allocation5 + $0x1b0] sm:$0xff]
    %v127 = vld [vmem:[#allocation5 + $0x1b8] sm:$0xff]
    %v128 = vld [vmem:[#allocation5 + $0x1c0] sm:$0xff]
    %v129 = vld [vmem:[#allocation5 + $0x1c8] sm:$0xff]
    %v130 = vld [vmem:[#allocation5 + $0x1d0] sm:$0xff]
    %v131 = vld [vmem:[#allocation5 + $0x1d8] sm:$0xff]
    %v132 = vld [vmem:[#allocation5 + $0x1e0] sm:$0xff]
    %v133 = vld [vmem:[#allocation5 + $0x1e8] sm:$0xff]
    %v134 = vld [vmem:[#allocation5 + $0x1f0] sm:$0xff]
    %v135 = vld [vmem:[#allocation5 + $0x1f8] sm:$0xff]
    %v136 = vld [vmem:[#allocation5 + $0x200] sm:$0xff]
    %v137 = vld [vmem:[#allocation5 + $0x208] sm:$0xff]
    %v138 = vld [vmem:[#allocation5 + $0x210] sm:$0xff]
    %v139 = vld [vmem:[#allocation5 + $0x218] sm:$0xff]
    %v140 = vld [vmem:[#allocation5 + $0x220] sm:$0xff]
    %v141 = vld [vmem:[#allocation5 + $0x228] sm:$0xff]
    %v142 = vld [vmem:[#allocation5 + $0x230] sm:$0xff]
    %v143 = vld [vmem:[#allocation5 + $0x238] sm:$0xff]
    %v144 = vld [vmem:[#allocation5 + $0x240] sm:$0xff]
    %v145 = vld [vmem:[#allocation5 + $0x248] sm:$0xff]
    %v146 = vld [vmem:[#allocation5 + $0x250] sm:$0xff]
    %v147 = vld [vmem:[#allocation5 + $0x258] sm:$0xff]
    %v148 = vld [vmem:[#allocation5 + $0x260] sm:$0xff]
    %v149 = vld [vmem:[#allocation5 + $0x268] sm:$0xff]
    %v150 = vld [vmem:[#allocation5 + $0x270] sm:$0xff]
    %v151 = vld [vmem:[#allocation5 + $0x278] sm:$0xff]
    %152 = vmatprep.subr.mxu0 0.0
    %153 = vmatpush1.msra.mxu0 %v72
    %154 = vmatprep.subr.mxu0 0.0
    %155 = vmatpush1.msra.mxu0 %v73
    %156 = vmatprep.subr.mxu0 0.0
    %157 = vmatpush1.msra.mxu0 %v74
    %158 = vmatprep.subr.mxu0 0.0
    %159 = vmatpush1.msra.mxu0 %v75
    %160 = vmatprep.subr.mxu0 0.0
    %161 = vmatpush1.msra.mxu0 %v76
    %162 = vmatprep.subr.mxu0 0.0
    %163 = vmatpush1.msra.mxu0 %v77
    %164 = vmatprep.subr.mxu0 0.0
    %165 = vmatpush1.msra.mxu0 %v78
    %166 = vmatprep.subr.mxu0 0.0
    %167 = vmatpush1.msra.mxu0 %v79
    %168 = vmatprep.subr.mxu0 0.0
    %169 = vmatpush1.msra.mxu0 %v80
    %170 = vmatprep.subr.mxu0 0.0
    %171 = vmatpush1.msra.mxu0 %v81
    %172 = vmatprep.subr.mxu0 0.0
    %173 = vmatpush1.msra.mxu0 %v82
    %174 = vmatprep.subr.mxu0 0.0
    %175 = vmatpush1.msra.mxu0 %v83
    %176 = vmatprep.subr.mxu0 0.0
    %177 = vmatpush1.msra.mxu0 %v84
    %178 = vmatprep.subr.mxu0 0.0
    %179 = vmatpush1.msra.mxu0 %v85
    %180 = vmatprep.subr.mxu0 0.0
    %181 = vmatpush1.msra.mxu0 %v86
    %182 = vmatprep.subr.mxu0 0.0
    %183 = vmatpush1.msra.mxu0 %v87
    %184 = vmatprep.subr.mxu0 0.0
    %185 = vmatpush1.msra.mxu0 %v88
    %186 = vmatprep.subr.mxu0 0.0
    %187 = vmatpush1.msra.mxu0 %v89
    %188 = vmatprep.subr.mxu0 0.0
    %189 = vmatpush1.msra.mxu0 %v90
    %190 = vmatprep.subr.mxu0 0.0
    %191 = vmatpush1.msra.mxu0 %v91
    %192 = vmatprep.subr.mxu0 0.0
    %193 = vmatpush1.msra.mxu0 %v92
    %194 = vmatprep.subr.mxu0 0.0
    %195 = vmatpush1.msra.mxu0 %v93
    %196 = vmatprep.subr.mxu0 0.0
    %197 = vmatpush1.msra.mxu0 %v94
    %198 = vmatprep.subr.mxu0 0.0
    %199 = vmatpush1.msra.mxu0 %v95
    %200 = vmatprep.subr.mxu0 0.0
    %201 = vmatpush1.msra.mxu0 %v96
    %202 = vmatprep.subr.mxu0 0.0
    %203 = vmatpush1.msra.mxu0 %v97
    %204 = vmatprep.subr.mxu0 0.0
    %205 = vmatpush1.msra.mxu0 %v98
    %206 = vmatprep.subr.mxu0 0.0
    %207 = vmatpush1.msra.mxu0 %v99
    %208 = vmatprep.subr.mxu0 0.0
    %209 = vmatpush1.msra.mxu0 %v100
    %210 = vmatprep.subr.mxu0 0.0
    %211 = vmatpush1.msra.mxu0 %v101
    %212 = vmatprep.subr.mxu0 0.0
    %213 = vmatpush1.msra.mxu0 %v102
    %214 = vmatprep.subr.mxu0 0.0
    %215 = vmatpush1.msra.mxu0 %v103
    %216 = vmatprep.mubr.f32.mxu0 %v53
    %217 = vmatmul.mubr.f32.gmra.mrb[0].mxu0 %v52
    %v218 = vpop.f32.mrb[0].mxu0
    %v219 = vadd.f32 0.0, %v218
    %v220 = vpop.f32.mrb[0].mxu0
    %221 = vmatprep.mubr.f32.mxu0 %v58
    %222 = vmatmul.mubr.f32.gmra.mrb[0].mxu0 %v57
    %v223 = vpop.f32.mrb[0].mxu0
    %v224 = vadd.f32 0.0, %v223
    %v225 = vpop.f32.mrb[0].mxu0
    %226 = vmatprep.mubr.f32.mxu0 %v63
    %227 = vmatmul.mubr.f32.gmra.mrb[0].mxu0 %v62
    %v228 = vpop.f32.mrb[0].mxu0
    %v229 = vadd.f32 0.0, %v228
    %v230 = vpop.f32.mrb[0].mxu0
    %231 = vmatprep.mubr.f32.mxu0 %v68
    %232 = vmatmul.mubr.f32.gmra.mrb[0].mxu0 %v67
    %v233 = vpop.f32.mrb[0].mxu0
    %v234 = vadd.f32 0.0, %v233
    %v235 = vpop.f32.mrb[0].mxu0
    %236 = vdwg.mxu0
    %237 = vmatprep.subr.mxu0 0.0
    %238 = vmatpush1.msra.mxu0 %v104
    %239 = vmatprep.subr.mxu0 0.0
    %240 = vmatpush1.msra.mxu0 %v105
    %241 = vmatprep.subr.mxu0 0.0
    %242 = vmatpush1.msra.mxu0 %v106
    %243 = vmatprep.subr.mxu0 0.0
    %244 = vmatpush1.msra.mxu0 %v107
    %245 = vmatprep.subr.mxu0 0.0
    %246 = vmatpush1.msra.mxu0 %v108
    %247 = vmatprep.subr.mxu0 0.0
    %248 = vmatpush1.msra.mxu0 %v109
    %249 = vmatprep.subr.mxu0 0.0
    %250 = vmatpush1.msra.mxu0 %v110
    %251 = vmatprep.subr.mxu0 0.0
    %252 = vmatpush1.msra.mxu0 %v111
    %253 = vmatprep.subr.mxu0 0.0
    %254 = vmatpush1.msra.mxu0 %v112
    %255 = vmatprep.subr.mxu0 0.0
    %256 = vmatpush1.msra.mxu0 %v113
    %257 = vmatprep.subr.mxu0 0.0
    %258 = vmatpush1.msra.mxu0 %v114
    %259 = vmatprep.subr.mxu0 0.0
    %260 = vmatpush1.msra.mxu0 %v115
    %261 = vmatprep.subr.mxu0 0.0
    %262 = vmatpush1.msra.mxu0 %v116
    %263 = vmatprep.subr.mxu0 0.0
    %264 = vmatpush1.msra.mxu0 %v117
    %265 = vmatprep.subr.mxu0 0.0
    %266 = vmatpush1.msra.mxu0 %v118
    %267 = vmatprep.subr.mxu0 0.0
    %268 = vmatpush1.msra.mxu0 %v119
    %269 = vmatprep.subr.mxu0 0.0
    %270 = vmatpush1.msra.mxu0 %v120
    %271 = vmatprep.subr.mxu0 0.0
    %272 = vmatpush1.msra.mxu0 %v121
    %273 = vmatprep.subr.mxu0 0.0
    %274 = vmatpush1.msra.mxu0 %v122
    %275 = vmatprep.subr.mxu0 0.0
    %276 = vmatpush1.msra.mxu0 %v123
    %277 = vmatprep.subr.mxu0 0.0
    %278 = vmatpush1.msra.mxu0 %v124
    %279 = vmatprep.subr.mxu0 0.0
    %280 = vmatpush1.msra.mxu0 %v125
    %281 = vmatprep.subr.mxu0 0.0
    %282 = vmatpush1.msra.mxu0 %v126
    %283 = vmatprep.subr.mxu0 0.0
    %284 = vmatpush1.msra.mxu0 %v127
    %285 = vmatprep.subr.mxu0 0.0
    %286 = vmatpush1.msra.mxu0 %v128
    %287 = vmatprep.subr.mxu0 0.0
    %288 = vmatpush1.msra.mxu0 %v129
    %289 = vmatprep.subr.mxu0 0.0
    %290 = vmatpush1.msra.mxu0 %v130
    %291 = vmatprep.subr.mxu0 0.0
    %292 = vmatpush1.msra.mxu0 %v131
    %293 = vmatprep.subr.mxu0 0.0
    %294 = vmatpush1.msra.mxu0 %v132
    %295 = vmatprep.subr.mxu0 0.0
    %296 = vmatpush1.msra.mxu0 %v133
    %297 = vmatprep.subr.mxu0 0.0
    %298 = vmatpush1.msra.mxu0 %v134
    %299 = vmatprep.subr.mxu0 0.0
    %300 = vmatpush1.msra.mxu0 %v135
    %301 = vmatprep.mubr.f32.mxu0 %v55
    %302 = vmatmul.mubr.f32.gmra.mrb[0].mxu0 %v54
    %v303 = vpop.f32.mrb[0].mxu0
    %v304 = vadd.f32 %v219, %v303
    %v305 = vpop.f32.mrb[0].mxu0
    %306 = vmatprep.mubr.f32.mxu0 %v60
    %307 = vmatmul.mubr.f32.gmra.mrb[0].mxu0 %v59
    %v308 = vpop.f32.mrb[0].mxu0
    %v309 = vadd.f32 %v224, %v308
    %v310 = vpop.f32.mrb[0].mxu0
    %311 = vmatprep.mubr.f32.mxu0 %v65
    %312 = vmatmul.mubr.f32.gmra.mrb[0].mxu0 %v64
    %v313 = vpop.f32.mrb[0].mxu0
    %v314 = vadd.f32 %v229, %v313
    %v315 = vpop.f32.mrb[0].mxu0
    %316 = vmatprep.mubr.f32.mxu0 %v70
    %317 = vmatmul.mubr.f32.gmra.mrb[0].mxu0 %v69
    %v318 = vpop.f32.mrb[0].mxu0
    %v319 = vadd.f32 %v234, %v318
    %v320 = vpop.f32.mrb[0].mxu0
    %321 = vdwg.mxu0
    %322 = vmatprep.subr.mxu0 0.0
    %323 = vmatpush1.msra.mxu0 %v136
    %324 = vmatprep.subr.mxu0 0.0
    %325 = vmatpush1.msra.mxu0 %v137
    %326 = vmatprep.subr.mxu0 0.0
    %327 = vmatpush1.msra.mxu0 %v138
    %328 = vmatprep.subr.mxu0 0.0
    %329 = vmatpush1.msra.mxu0 %v139
    %330 = vmatprep.subr.mxu0 0.0
    %331 = vmatpush1.msra.mxu0 %v140
    %332 = vmatprep.subr.mxu0 0.0
    %333 = vmatpush1.msra.mxu0 %v141
    %334 = vmatprep.subr.mxu0 0.0
    %335 = vmatpush1.msra.mxu0 %v142
    %336 = vmatprep.subr.mxu0 0.0
    %337 = vmatpush1.msra.mxu0 %v143
    %338 = vmatprep.subr.mxu0 0.0
    %339 = vmatpush1.msra.mxu0 %v144
    %340 = vmatprep.subr.mxu0 0.0
    %341 = vmatpush1.msra.mxu0 %v145
    %342 = vmatprep.subr.mxu0 0.0
    %343 = vmatpush1.msra.mxu0 %v146
    %344 = vmatprep.subr.mxu0 0.0
    %345 = vmatpush1.msra.mxu0 %v147
    %346 = vmatprep.subr.mxu0 0.0
    %347 = vmatpush1.msra.mxu0 %v148
    %348 = vmatprep.subr.mxu0 0.0
    %349 = vmatpush1.msra.mxu0 %v149
    %350 = vmatprep.subr.mxu0 0.0
    %351 = vmatpush1.msra.mxu0 %v150
    %352 = vmatprep.subr.mxu0 0.0
    %353 = vmatpush1.msra.mxu0 %v151
    %354 = vmatprep.subr.mxu0 0.0
    %355 = vmatpush1.msra.mxu0 0.0
    %356 = vmatprep.subr.mxu0 0.0
    %357 = vmatpush1.msra.mxu0 0.0
    %358 = vmatprep.subr.mxu0 0.0
    %359 = vmatpush1.msra.mxu0 0.0
    %360 = vmatprep.subr.mxu0 0.0
    %361 = vmatpush1.msra.mxu0 0.0
    %362 = vmatprep.subr.mxu0 0.0
    %363 = vmatpush1.msra.mxu0 0.0
    %364 = vmatprep.subr.mxu0 0.0
    %365 = vmatpush1.msra.mxu0 0.0
    %366 = vmatprep.subr.mxu0 0.0
    %367 = vmatpush1.msra.mxu0 0.0
    %368 = vmatprep.subr.mxu0 0.0
    %369 = vmatpush1.msra.mxu0 0.0
    %370 = vmatprep.subr.mxu0 0.0
    %371 = vmatpush1.msra.mxu0 0.0
    %372 = vmatprep.subr.mxu0 0.0
    %373 = vmatpush1.msra.mxu0 0.0
    %374 = vmatprep.subr.mxu0 0.0
    %375 = vmatpush1.msra.mxu0 0.0
    %376 = vmatprep.subr.mxu0 0.0
    %377 = vmatpush1.msra.mxu0 0.0
    %378 = vmatprep.subr.mxu0 0.0
    %379 = vmatpush1.msra.mxu0 0.0
    %380 = vmatprep.subr.mxu0 0.0
    %381 = vmatpush1.msra.mxu0 0.0
    %382 = vmatprep.subr.mxu0 0.0
    %383 = vmatpush1.msra.mxu0 0.0
    %384 = vmatprep.subr.mxu0 0.0
    %385 = vmatpush1.msra.mxu0 0.0
    %386 = vmatprep.mubr.f32.mxu0 0.0
    %387 = vmatmul.mubr.f32.gmra.mrb[0].mxu0 %v56
    %v388 = vpop.f32.mrb[0].mxu0
    %v389 = vadd.f32 %v304, %v388
    %v390 = vpop.f32.mrb[0].mxu0
    %391 = vmatprep.mubr.f32.mxu0 0.0
    %392 = vmatmul.mubr.f32.gmra.mrb[0].mxu0 %v61
    %v393 = vpop.f32.mrb[0].mxu0
    %v394 = vadd.f32 %v309, %v393
    %v395 = vpop.f32.mrb[0].mxu0
    %396 = vmatprep.mubr.f32.mxu0 0.0
    %397 = vmatmul.mubr.f32.gmra.mrb[0].mxu0 %v66
    %v398 = vpop.f32.mrb[0].mxu0
    %v399 = vadd.f32 %v314, %v398
    %v400 = vpop.f32.mrb[0].mxu0
    %401 = vmatprep.mubr.f32.mxu0 0.0
    %402 = vmatmul.mubr.f32.gmra.mrb[0].mxu0 %v71
    %v403 = vpop.f32.mrb[0].mxu0
    %v404 = vadd.f32 %v319, %v403
    %v405 = vpop.f32.mrb[0].mxu0
    %406 = vdwg.mxu0
    %v407 = vadd.f32 %v48, %v389
    %v408 = vadd.f32 %v49, %v394
    %v409 = vadd.f32 %v50, %v399
    %v410 = vadd.f32 %v51, %v404
    %411 = vst [vmem:[#allocation7] sm:$0xff] %v407
    %412 = vst [vmem:[#allocation7 + $0x8] sm:$0xff] %v408
    %413 = vst [vmem:[#allocation7 + $0x10] sm:$0xff] %v409
    %414 = vst [vmem:[#allocation7 + $0x18] sm:$0xff] %v410
    // Predicated region
    $region22: #{tpu_custom_call.1} parent=1 // pred_check
      _
    $region23: #{tpu_custom_call.1} parent=1 // pred_check_branch
      %416 = sbr.rel (0) target = $region25
    $region24: #{tpu_custom_call.1} parent=1 // pred_region
      %s418 = ssub.s32 512, 512
      %419 = vsyncadd [#allocation4], %s418
      %s420 = sshll.u32 [#allocation7], 4
      %s421 = int_to_ptr.vmem [resolvable:$true] %s420
      %426 = dma.vmem_to_hbm [thread:$0]  %s421, 512, %s2, [#allocation4], 128, 128, 8
    $region25: #{tpu_custom_call.1} parent=1 // pred_fallthru
      _
    // Predicated region
    $region26: #{tpu_custom_call.1} parent=1 // pred_check
      _
    $region27: #{tpu_custom_call.1} parent=1 // pred_check_branch
      %428 = sbr.rel (0) target = $region29
    $region28: #{tpu_custom_call.1} parent=1 // pred_region
      %429 = dma.done [#allocation4], 512
    $region29: #{tpu_custom_call.1} parent=1 // pred_fallthru
      _
    %430 = vsyncpa [#allocation3], 1
    %431 = vsyncpa [#allocation6], 1
    %432 = vsyncpa [#allocation4], 1

</llo_original>
